<compile_context>
chip_gen: v5e
topology: v5e:2x2
jax: 0.10.0
libtpu: 0.0.40
codegen_flags: <defaults>
</compile_context>

<pallas_src>
import math

import jax
import jax.numpy as jnp
from jax.experimental import pallas as pl
from jax.experimental.pallas import tpu as pltpu


def _add_bias_kernel(x_ref, b_ref, o_ref):
    # x_ref: (tile_r, tile_c); b_ref: (1, tile_c) or (tile_r, 1).
    # jnp broadcasting covers both bias layouts; pure VPU add.
    o_ref[...] = x_ref[...] + b_ref[...]


def _choose_tiles(rows, cols, itemsize):
    """Pick (tile_r, tile_c) targeting ~4 MiB blocks, sublane/lane aligned."""
    # Sub-32-bit dtypes pack along sublanes: 8 (f32) / 16 (bf16) / 32 (int8).
    pack = 8 * max(1, 4 // itemsize)
    target_bytes = 4 * 1024 * 1024

    # Lane tile: keep the full lane extent unless even a minimal-row block
    # would blow the target; then tile lanes with a multiple of 128.
    if cols * itemsize * pack <= target_bytes:
        tile_c = cols
    else:
        tile_c = 2048  # multiple of 128

    # Row tile: as many rows as fit in the target, rounded to the pack size.
    max_r = max(1, target_bytes // (tile_c * itemsize))
    if max_r >= rows:
        tile_r = rows
    else:
        tile_r = max(pack, (max_r // pack) * pack)
    return tile_r, tile_c


def _run_2d(x2, bias, bias_on_rows):
    """Broadcast-add over a 2-D slab.

    x2:   (rows, cols)
    bias: (1, cols) if bias_on_rows else (rows, 1)
    """
    rows, cols = x2.shape
    itemsize = jnp.dtype(x2.dtype).itemsize
    tile_r, tile_c = _choose_tiles(rows, cols, itemsize)
    grid = (pl.cdiv(rows, tile_r), pl.cdiv(cols, tile_c))

    if bias_on_rows:
        b_spec = pl.BlockSpec((1, tile_c), lambda i, j: (0, j))
    else:
        b_spec = pl.BlockSpec((tile_r, 1), lambda i, j: (i, 0))

    cost = pl.CostEstimate(
        flops=rows * cols,
        transcendentals=0,
        bytes_accessed=2 * rows * cols * itemsize + bias.size * itemsize,
    )

    return pl.pallas_call(
        _add_bias_kernel,
        out_shape=jax.ShapeDtypeStruct((rows, cols), x2.dtype),
        grid=grid,
        in_specs=[
            pl.BlockSpec((tile_r, tile_c), lambda i, j: (i, j)),
            b_spec,
        ],
        out_specs=pl.BlockSpec((tile_r, tile_c), lambda i, j: (i, j)),
        compiler_params=pltpu.CompilerParams(
            dimension_semantics=("parallel", "parallel")
        ),
        cost_estimate=cost,
    )(x2, bias)


def add_bias(x, bias_param):
    """Forward pass of AddBias.

    bias_param has shape (C, 1) (matching nn.Parameter(bias.unsqueeze(1))).
    x is either (N, C) or NCHW (N, C, H, W).
    """
    b_vec = bias_param.reshape(-1).astype(x.dtype)  # (C,)

    if x.ndim == 2:
        rows, C = x.shape
        b_row = b_vec.reshape(1, C)
        # Lane-densify small C: fold k rows into lanes so k*C % 128 == 0.
        # (rows, C) -> (rows//k, k*C) is a pure row-major reshape (no copy).
        if C % 128 != 0:
            k = 128 // math.gcd(C, 128)
            if k > 1 and rows % k == 0 and rows >= k:
                x_f = x.reshape(rows // k, k * C)
                b_f = jnp.tile(b_row, (1, k))
                o_f = _run_2d(x_f, b_f, bias_on_rows=True)
                return o_f.reshape(rows, C)
        return _run_2d(x, b_row, bias_on_rows=True)

    elif x.ndim == 4:
        N, C, H, W = x.shape
        # No transposes: NCHW -> (N*C, H*W) is a pure reshape; H*W lands on
        # the lane axis.  Bias becomes a tiny per-row column (N*C, 1).
        x2 = x.reshape(N * C, H * W)
        b_col = jnp.tile(b_vec, N).reshape(N * C, 1)
        o2 = _run_2d(x2, b_col, bias_on_rows=False)
        return o2.reshape(N, C, H, W)

    else:
        raise ValueError(f"unsupported rank {x.ndim}")


if __name__ == "__main__":
    key = jax.random.PRNGKey(0)
    k_b, k_x2, k_x2b, k_x4 = jax.random.split(key, 4)

    # Deterministic parameter init: bias vector of length C, stored as (C, 1).
    C = 4
    bias_vec = jax.random.normal(k_b, (C,), dtype=jnp.float32)
    bias_param = bias_vec[:, None]  # (C, 1), matches bias.unsqueeze(1)

    # Case 1: small 2-D input (N, C) — e.g. action-logit bias in policy head.
    x2d = jax.random.normal(k_x2, (2, C), dtype=jnp.float32)
    out2d = jax.block_until_ready(add_bias(x2d, bias_param))
    ref2d = x2d + bias_vec.reshape(1, C)

    # Case 2: 2-D input with enough rows to exercise the lane-fold path.
    x2d_big = jax.random.normal(k_x2b, (256, C), dtype=jnp.float32)
    out2d_big = jax.block_until_ready(add_bias(x2d_big, bias_param))
    ref2d_big = x2d_big + bias_vec.reshape(1, C)

    # Case 3: 4-D NCHW input (N, C, H, W) — no transposes, (N*C, H*W) view.
    x4d = jax.random.normal(k_x4, (2, C, 16, 16), dtype=jnp.float32)
    out4d = jax.block_until_ready(add_bias(x4d, bias_param))
    ref4d = x4d + bias_vec.reshape(1, C, 1, 1)

    assert out2d.shape == ref2d.shape and out2d.dtype == ref2d.dtype
    assert out2d_big.shape == ref2d_big.shape
    assert out4d.shape == ref4d.shape and out4d.dtype == ref4d.dtype
    assert jnp.allclose(out2d, ref2d, atol=1e-6, rtol=1e-6)
    assert jnp.allclose(out2d_big, ref2d_big, atol=1e-6, rtol=1e-6)
    assert jnp.allclose(out4d, ref4d, atol=1e-6, rtol=1e-6)

    print("KERNEL_OK")
</pallas_src>

<mosaic_0001>
module attributes {stable_mosaic.version = 11 : i64} {
  func.func @_add_bias_kernel(%arg0: i32, %arg1: i32, %arg2: memref<2x4xf32, #tpu.memory_space<vmem>>, %arg3: memref<1x4xf32, #tpu.memory_space<vmem>>, %arg4: memref<2x4xf32, #tpu.memory_space<vmem>>) attributes {dimension_semantics = [#tpu.dimension_semantics<parallel>, #tpu.dimension_semantics<parallel>], iteration_bounds = array<i64: 1, 1>, scalar_prefetch = 0 : i64, scratch_operands = 0 : i64, tpu.core_type = #tpu.core_type<tc>, window_params = [{transform_indices = @transform_0, window_bounds = array<i64: 2, 4>}, {transform_indices = @transform_1, window_bounds = array<i64: 1, 4>}, {transform_indices = @transform_2, window_bounds = array<i64: 2, 4>}]} {
    %c0 = arith.constant 0 : index
    %c0_0 = arith.constant 0 : index
    %0 = vector.load %arg2[%c0, %c0_0] : memref<2x4xf32, #tpu.memory_space<vmem>>, vector<2x4xf32>
    %c0_1 = arith.constant 0 : index
    %c0_2 = arith.constant 0 : index
    %1 = vector.load %arg3[%c0_1, %c0_2] : memref<1x4xf32, #tpu.memory_space<vmem>>, vector<1x4xf32>
    %2 = vector.broadcast %1 : vector<1x4xf32> to vector<2x4xf32>
    %3 = arith.addf %0, %2 : vector<2x4xf32>
    %c0_3 = arith.constant 0 : index
    %c0_4 = arith.constant 0 : index
    %4 = vector.load %arg4[%c0_3, %c0_4] : memref<2x4xf32, #tpu.memory_space<vmem>>, vector<2x4xf32>
    tpu.vector_store %arg4[%c0_3, %c0_4], %3 {strides = array<i32>} : memref<2x4xf32, #tpu.memory_space<vmem>>, vector<2x4xf32>,
    return
  }
  func.func @transform_0(%arg0: i32, %arg1: i32) -> (i32, i32) {
    %c0_i32 = arith.constant 0 : i32
    return %arg0, %arg1 : i32, i32
  }
  func.func @transform_1(%arg0: i32, %arg1: i32) -> (i32, i32) {
    %c0_i32 = arith.constant 0 : i32
    %c0_i32_0 = arith.constant 0 : i32
    return %c0_i32, %arg1 : i32, i32
  }
  func.func @transform_2(%arg0: i32, %arg1: i32) -> (i32, i32) {
    %c0_i32 = arith.constant 0 : i32
    return %arg0, %arg1 : i32, i32
  }
}

</mosaic_0001>

<llo_original>
// kernel: tpu_custom_call.1
$region0: #{tpu_custom_call.1}
  #allocation0 [shape = 'u32[]', space=smem, size = 0x4, offset = 0x4, fixed_abs, tag = 'smem constant byte address 0x4 - core index']
  #allocation1 [shape = 'u32[72,128]{1,0:T(1,128)}', space=vmem, size = 0x9000, scoped, tag = 'internal scratch']
  %s0 = inlined_call_operand.hbm [shape: f32[2,4], index: 0, kind: input, shape index: {}]
  %s1 = inlined_call_operand.hbm [shape: f32[1,4], index: 1, kind: input, shape index: {}]
  %s2 = inlined_call_operand.hbm [shape: f32[2,4], index: 2, kind: output, shape index: {}]
  %s3 = sld [smem:[#allocation0]]
  $region26: #{tpu_custom_call.1} parent=0
    _
  %s5 = ssub.s32 1, %s3
  %s6 = scalar_select 0, %s5, %s3
  $region1: #{tpu_custom_call.1} parent=0
    #allocation2 [shape = 'u8[1024]{0}', space=vmem, size = 0x400, scoped, tag = 'input window, operand 0, single buffered']
    #allocation3 [shape = 's32[1]{0}', space=sflag, size = 0x4, scoped, tag = 'scoped memory for tpu_custom_call.1']
    #allocation4 [shape = 's32[1]{0}', space=sflag, size = 0x4, scoped, tag = 'scoped memory for tpu_custom_call.1']
    #allocation5 [shape = 'u8[512]{0}', space=vmem, size = 0x400, scoped, tag = 'input window, operand 1, single buffered']
    #allocation6 [shape = 's32[1]{0}', space=sflag, size = 0x4, scoped, tag = 'scoped memory for tpu_custom_call.1']
    #allocation7 [shape = 'u8[1024]{0}', space=vmem, size = 0x400, scoped, tag = 'output window, operand 0, single buffered']
    %7 = vsyncpa [#allocation3], 0
    %8 = vsyncpa [#allocation6], 0
    %9 = vsyncpa [#allocation4], 0
    // Predicated region
    $region2: #{tpu_custom_call.1} parent=1 // pred_check
      _
    $region3: #{tpu_custom_call.1} parent=1 // pred_check_branch
      %11 = sbr.rel (0) target = $region5
    $region4: #{tpu_custom_call.1} parent=1 // pred_region
      %13 = vsyncadd [#allocation3], 0
      %s15 = sshll.u32 %s0, 4
      %s16 = int_to_ptr.hbm [resolvable:$true] %s15
      %s17 = sshll.u32 [#allocation2], 4
      %s18 = int_to_ptr.vmem [resolvable:$true] %s17
      %20 = dma.hbm_to_vmem [thread:$0]  %s16, 32, %s18, [#allocation3]
    $region5: #{tpu_custom_call.1} parent=1 // pred_fallthru
      _
    // Predicated region
    $region6: #{tpu_custom_call.1} parent=1 // pred_check
      _
    $region7: #{tpu_custom_call.1} parent=1 // pred_check_branch
      %22 = sbr.rel (0) target = $region9
    $region8: #{tpu_custom_call.1} parent=1 // pred_region
      %24 = vsyncadd [#allocation6], 0
      %s26 = sshll.u32 %s1, 4
      %s27 = int_to_ptr.hbm [resolvable:$true] %s26
      %s28 = sshll.u32 [#allocation5], 4
      %s29 = int_to_ptr.vmem [resolvable:$true] %s28
      %31 = dma.hbm_to_vmem [thread:$0]  %s27, 16, %s29, [#allocation6]
    $region9: #{tpu_custom_call.1} parent=1 // pred_fallthru
      _
    // Predicated region
    $region10: #{tpu_custom_call.1} parent=1 // pred_check
      _
    $region11: #{tpu_custom_call.1} parent=1 // pred_check_branch
      %33 = sbr.rel (0) target = $region13
    $region12: #{tpu_custom_call.1} parent=1 // pred_region
      %35 = dma.done [#allocation3], 32
    $region13: #{tpu_custom_call.1} parent=1 // pred_fallthru
      _
    // Predicated region
    $region14: #{tpu_custom_call.1} parent=1 // pred_check
      _
    $region15: #{tpu_custom_call.1} parent=1 // pred_check_branch
      %37 = sbr.rel (0) target = $region17
    $region16: #{tpu_custom_call.1} parent=1 // pred_region
      %39 = dma.done [#allocation6], 16
    $region17: #{tpu_custom_call.1} parent=1 // pred_fallthru
      _
    %v40 = vld [vmem:[#allocation2] sm:$0x3]
    %v41 = vld [vmem:[#allocation5] sm:$0x1]
    %v43 = vperm.slane %v41, 0
    %v45 = vadd.f32 %v40, %v43
    %vm46 = vcmask 25600
    %47 = vst.msk [vmem:[#allocation7] sm:$0x3] %vm46, %v45
    // Predicated region
    $region18: #{tpu_custom_call.1} parent=1 // pred_check
      _
    $region19: #{tpu_custom_call.1} parent=1 // pred_check_branch
      %49 = sbr.rel (0) target = $region21
    $region20: #{tpu_custom_call.1} parent=1 // pred_region
      %51 = vsyncadd [#allocation4], 0
      %s53 = sshll.u32 [#allocation7], 4
      %s54 = int_to_ptr.vmem [resolvable:$true] %s53
      %s55 = sshll.u32 %s2, 4
      %s56 = int_to_ptr.hbm [resolvable:$true] %s55
      %58 = dma.vmem_to_hbm [thread:$0]  %s54, 32, %s56, [#allocation4]
    $region21: #{tpu_custom_call.1} parent=1 // pred_fallthru
      _
    // Predicated region
    $region22: #{tpu_custom_call.1} parent=1 // pred_check
      _
    $region23: #{tpu_custom_call.1} parent=1 // pred_check_branch
      %60 = sbr.rel (0) target = $region25
    $region24: #{tpu_custom_call.1} parent=1 // pred_region
      %62 = dma.done [#allocation4], 32
    $region25: #{tpu_custom_call.1} parent=1 // pred_fallthru
      _
    %63 = vsyncpa [#allocation3], 1
    %64 = vsyncpa [#allocation6], 1
    %65 = vsyncpa [#allocation4], 1

</llo_original>
